<compile_context>
chip_gen: v6e
topology: v6e:2x2x1
jax: 0.10.0
libtpu: 0.0.40
codegen_flags: <defaults>
</compile_context>

<pallas_src>
import functools

import jax
import jax.numpy as jnp
from jax import lax
from jax.experimental import pallas as pl
from jax.experimental.pallas import tpu as pltpu


def _round_up(a: int, b: int) -> int:
    return (a + b - 1) // b * b


def _sublane_multiple(dtype) -> int:
    # 8 sublanes of 32-bit; sub-32-bit dtypes pack along sublanes.
    bits = jnp.dtype(dtype).itemsize * 8
    return max(8, 256 // bits)  # f32 -> 8, bf16 -> 16, int8/fp8 -> 32


def _pick_tile(dim: int, max_tile: int, align: int) -> int:
    """Balanced tile <= max_tile, multiple of `align`, minimal pad waste."""
    dim_a = _round_up(dim, align)
    if dim_a <= max_tile:
        return dim_a
    n_blocks = pl.cdiv(dim_a, max_tile)
    return _round_up(pl.cdiv(dim_a, n_blocks), align)


# ------------------------------ kernel body ---------------------------------
def _linear_sin_kernel(x_ref, w_ref, b_ref, o_ref, acc_ref):
    """One (tm, tn) output tile; grid axis 2 reduces over K in tk chunks."""
    k = pl.program_id(2)

    @pl.when(k == 0)
    def _():
        # Fold bias into the f32 accumulator init (epilogue only does sin).
        acc_ref[...] = jnp.broadcast_to(
            b_ref[...].astype(jnp.float32), acc_ref.shape
        )

    # x tile: (tm, tk); w tile: (tn, tk). Contract over K (axis 1 of both),
    # i.e. x @ w.T — the wrapper never materializes weight.T in HBM, and the
    # MXU sees native-dtype operands with an f32 accumulator.
    acc_ref[...] += lax.dot_general(
        x_ref[...],
        w_ref[...],
        dimension_numbers=(((1,), (1,)), ((), ())),
        preferred_element_type=jnp.float32,
    )

    @pl.when(k == pl.num_programs(2) - 1)
    def _():
        # Fused epilogue: sin on the full lane-dense tile, write final dtype.
        o_ref[...] = jnp.sin(acc_ref[...]).astype(o_ref.dtype)


# ------------------------------ host wrapper --------------------------------
@functools.partial(jax.jit, static_argnames=("tm", "tn", "tk"))
def linear_sin_act(x, weight, bias, *, tm=256, tn=256, tk=2048):
    """y = sin(x @ weight.T + bias), PyTorch nn.Linear convention.

    x:      (..., in_features)          (native dtype, e.g. f32 or bf16)
    weight: (out_features, in_features) (native dtype)
    bias:   (out_features,)
    """
    out_dtype = x.dtype
    *lead, K = x.shape
    N, Kw = weight.shape
    assert Kw == K, (Kw, K)

    M = 1
    for d in lead:
        M *= d
    x2 = x.reshape(M, K)                 # no upcast
    w = weight                           # (N, K): no transpose, no upcast
    b = bias.astype(jnp.float32)         # tiny; folded into the f32 accumulator

    sub_m = max(_sublane_multiple(x.dtype), _sublane_multiple(out_dtype))

    tm_ = _pick_tile(M, tm, sub_m)
    tn_ = _pick_tile(N, tn, 128)         # lane axis of output / sublane of w
    tk_ = _pick_tile(K, tk, 128)         # lane axis of x and w

    # v7x has 2 TensorCores: if both "parallel" axes collapse to one block,
    # split the N tile so the grid can be sharded across cores.
    if _round_up(M, tm_) // tm_ == 1 and _round_up(N, tn_) // tn_ == 1 and tn_ >= 256:
        tn_ = _round_up(tn_ // 2, 128)

    Mp = _round_up(M, tm_)
    Np = _round_up(N, tn_)
    Kp = _round_up(K, tk_)

    if (Mp, Kp) != (M, K):
        x2 = jnp.pad(x2, ((0, Mp - M), (0, Kp - K)))
    if (Np, Kp) != (N, K):
        w = jnp.pad(w, ((0, Np - N), (0, Kp - K)))
    if Np != N:
        b = jnp.pad(b, (0, Np - N))
    b2 = b.reshape(1, Np)

    grid = (Mp // tm_, Np // tn_, Kp // tk_)

    out = pl.pallas_call(
        _linear_sin_kernel,
        out_shape=jax.ShapeDtypeStruct((Mp, Np), out_dtype),
        grid_spec=pltpu.PrefetchScalarGridSpec(
            num_scalar_prefetch=0,
            grid=grid,
            in_specs=[
                pl.BlockSpec((tm_, tk_), lambda i, j, k: (i, k)),   # x tile
                pl.BlockSpec((tn_, tk_), lambda i, j, k: (j, k)),   # w tile (N,K)
                pl.BlockSpec((1, tn_), lambda i, j, k: (0, j)),     # bias tile
            ],
            out_specs=pl.BlockSpec((tm_, tn_), lambda i, j, k: (i, j)),
            scratch_shapes=[pltpu.VMEM((tm_, tn_), jnp.float32)],
        ),
        compiler_params=pltpu.CompilerParams(
            dimension_semantics=("parallel", "parallel", "arbitrary"),
        ),
    )(x2, w, b2)

    y = out[:M, :N]
    return y.reshape(*lead, N)


# ------------------------------------ main ------------------------------------
if __name__ == "__main__":
    key = jax.random.PRNGKey(0)
    kx, kw, kb = jax.random.split(key, 3)

    batch, seq, in_features, out_features = 2, 8, 32, 64

    x = jax.random.normal(kx, (batch, seq, in_features), jnp.float32)
    # PyTorch nn.Linear default init: U(-1/sqrt(fan_in), 1/sqrt(fan_in)).
    bound = 1.0 / jnp.sqrt(in_features)
    weight = jax.random.uniform(
        kw, (out_features, in_features), jnp.float32, -bound, bound)
    bias = jax.random.uniform(kb, (out_features,), jnp.float32, -bound, bound)

    # f32 path (exact parity with the PyTorch forward semantics).
    y = linear_sin_act(x, weight, bias)
    y = jax.block_until_ready(y)
    y_ref = jnp.sin(jnp.einsum("bsk,nk->bsn", x, weight) + bias)
    assert y.shape == (batch, seq, out_features)
    assert bool(jnp.allclose(y, y_ref, atol=1e-5, rtol=1e-5)), "f32 mismatch vs ref"

    # bf16 path (native-dtype MXU operands, f32 accumulation) — looser tol.
    xb, wb, bb = x.astype(jnp.bfloat16), weight.astype(jnp.bfloat16), bias.astype(jnp.bfloat16)
    yb = jax.block_until_ready(linear_sin_act(xb, wb, bb))
    assert yb.dtype == jnp.bfloat16
    assert bool(jnp.allclose(yb.astype(jnp.float32), y_ref, atol=3e-2, rtol=3e-2)), \
        "bf16 mismatch vs ref"

    print("KERNEL_OK")
</pallas_src>

<mosaic_0001>
module attributes {stable_mosaic.version = 11 : i64} {
  func.func @_linear_sin_kernel(%arg0: i32, %arg1: i32, %arg2: i32, %arg3: memref<16x128xf32, #tpu.memory_space<vmem>>, %arg4: memref<128x128xf32, #tpu.memory_space<vmem>>, %arg5: memref<1x128xf32, #tpu.memory_space<vmem>>, %arg6: memref<16x128xf32, #tpu.memory_space<vmem>>, %arg7: memref<16x128xf32, #tpu.memory_space<vmem>>) attributes {dimension_semantics = [#tpu.dimension_semantics<parallel>, #tpu.dimension_semantics<parallel>, #tpu.dimension_semantics<arbitrary>], iteration_bounds = array<i64: 1, 1, 1>, scalar_prefetch = 0 : i64, scratch_operands = 1 : i64, tpu.core_type = #tpu.core_type<tc>, window_params = [{transform_indices = @transform_0, window_bounds = array<i64: 16, 128>}, {transform_indices = @transform_1, window_bounds = array<i64: 128, 128>}, {transform_indices = @transform_2, window_bounds = array<i64: 1, 128>}, {transform_indices = @transform_3, window_bounds = array<i64: 16, 128>}]} {
    %c0_i32 = arith.constant 0 : i32
    %0 = arith.cmpi eq, %arg2, %c0_i32 : i32
    %1 = arith.extui %0 : i1 to i32
    %c0_i32_0 = arith.constant 0 : i32
    %2 = arith.cmpi ne, %1, %c0_i32_0 : i32
    scf.if %2 {
      %c0_10 = arith.constant 0 : index
      %c0_11 = arith.constant 0 : index
      %12 = vector.load %arg5[%c0_10, %c0_11] : memref<1x128xf32, #tpu.memory_space<vmem>>, vector<1x128xf32>
      %13 = vector.shape_cast %12 : vector<1x128xf32> to vector<1x128xf32>
      %14 = vector.broadcast %13 : vector<1x128xf32> to vector<16x128xf32>
      %c0_12 = arith.constant 0 : index
      %c0_13 = arith.constant 0 : index
      %15 = vector.load %arg7[%c0_12, %c0_13] : memref<16x128xf32, #tpu.memory_space<vmem>>, vector<16x128xf32>
      tpu.vector_store %arg7[%c0_12, %c0_13], %14 {strides = array<i32>} : memref<16x128xf32, #tpu.memory_space<vmem>>, vector<16x128xf32>,
    } else {
    }
    %c0 = arith.constant 0 : index
    %c0_1 = arith.constant 0 : index
    %3 = vector.load %arg7[%c0, %c0_1] : memref<16x128xf32, #tpu.memory_space<vmem>>, vector<16x128xf32>
    %c0_2 = arith.constant 0 : index
    %c0_3 = arith.constant 0 : index
    %4 = vector.load %arg3[%c0_2, %c0_3] : memref<16x128xf32, #tpu.memory_space<vmem>>, vector<16x128xf32>
    %c0_4 = arith.constant 0 : index
    %c0_5 = arith.constant 0 : index
    %5 = vector.load %arg4[%c0_4, %c0_5] : memref<128x128xf32, #tpu.memory_space<vmem>>, vector<128x128xf32>
    %cst = arith.constant dense<0.000000e+00> : vector<16x128xf32>
    %6 = tpu.matmul %4, %5, %cst {dimension_numbers = #tpu.dot_dimension_numbers<[1], [1], [0], [0], [0, 0, 1, 0], [], []>} : vector<16x128xf32>, vector<128x128xf32>, vector<16x128xf32> -> vector<16x128xf32>
    %7 = arith.addf %3, %6 : vector<16x128xf32>
    %c0_6 = arith.constant 0 : index
    %c0_7 = arith.constant 0 : index
    %8 = vector.load %arg7[%c0_6, %c0_7] : memref<16x128xf32, #tpu.memory_space<vmem>>, vector<16x128xf32>
    tpu.vector_store %arg7[%c0_6, %c0_7], %7 {strides = array<i32>} : memref<16x128xf32, #tpu.memory_space<vmem>>, vector<16x128xf32>,
    %c0_i32_8 = arith.constant 0 : i32
    %9 = arith.cmpi eq, %arg2, %c0_i32_8 : i32
    %10 = arith.extui %9 : i1 to i32
    %c0_i32_9 = arith.constant 0 : i32
    %11 = arith.cmpi ne, %10, %c0_i32_9 : i32
    scf.if %11 {
      %c0_10 = arith.constant 0 : index
      %c0_11 = arith.constant 0 : index
      %12 = vector.load %arg7[%c0_10, %c0_11] : memref<16x128xf32, #tpu.memory_space<vmem>>, vector<16x128xf32>
      %13 = math.sin %12 : vector<16x128xf32>
      %c0_12 = arith.constant 0 : index
      %c0_13 = arith.constant 0 : index
      %14 = vector.load %arg6[%c0_12, %c0_13] : memref<16x128xf32, #tpu.memory_space<vmem>>, vector<16x128xf32>
      tpu.vector_store %arg6[%c0_12, %c0_13], %13 {strides = array<i32>} : memref<16x128xf32, #tpu.memory_space<vmem>>, vector<16x128xf32>,
    } else {
    }
    return
  }
  func.func @transform_0(%arg0: i32, %arg1: i32, %arg2: i32) -> (i32, i32) {
    %c0_i32 = arith.constant 0 : i32
    return %arg0, %arg2 : i32, i32
  }
  func.func @transform_1(%arg0: i32, %arg1: i32, %arg2: i32) -> (i32, i32) {
    %c0_i32 = arith.constant 0 : i32
    return %arg1, %arg2 : i32, i32
  }
  func.func @transform_2(%arg0: i32, %arg1: i32, %arg2: i32) -> (i32, i32) {
    %c0_i32 = arith.constant 0 : i32
    %c0_i32_0 = arith.constant 0 : i32
    return %c0_i32, %arg1 : i32, i32
  }
  func.func @transform_3(%arg0: i32, %arg1: i32, %arg2: i32) -> (i32, i32) {
    %c0_i32 = arith.constant 0 : i32
    return %arg0, %arg1 : i32, i32
  }
}

</mosaic_0001>

<llo_original>
// kernel: linear_sin_act.1
$region0: #{linear_sin_act.1}
  #allocation0 [shape = 'u32[]', space=smem, size = 0x4, offset = 0x4, fixed_abs, tag = 'smem constant byte address 0x4 - core index']
  #allocation1 [shape = 'u32[144,128]{1,0:T(1,128)}', space=vmem, size = 0x12000, scoped, tag = 'internal scratch']
  #allocation2 [shape = 'f32[16,128]{1,0:T(8,128)}', space=vmem, size = 0x2000, scoped, tag = 'scratch operand']
  %s0 = inlined_call_operand.vmem [shape: f32[16,128], index: 0, kind: input, shape index: {}]
  %s1 = inlined_call_operand.vmem [shape: f32[128,128], index: 1, kind: input, shape index: {}]
  %s2 = inlined_call_operand.vmem [shape: f32[1,128], index: 2, kind: input, shape index: {}]
  %s3 = inlined_call_operand.vmem [shape: f32[16,128], index: 3, kind: output, shape index: {}]
  %s4 = sld [smem:[#allocation0]]
  $region30: #{linear_sin_act.1} parent=0
    _
  %s6 = ssub.s32 1, %s4
  %s7 = scalar_select 0, %s6, %s4
  // Predicated region
  $region2: #{linear_sin_act.1} parent=0 // pred_check
    _
  $region3: #{linear_sin_act.1} parent=0 // pred_check_branch
    %9 = sbr.rel (0) target = $region5
  $region4: #{linear_sin_act.1} parent=0 // pred_region
    _
  $region5: #{linear_sin_act.1} parent=0 // pred_fallthru
    _
  // Predicated region
  $region6: #{linear_sin_act.1} parent=0 // pred_check
    _
  $region7: #{linear_sin_act.1} parent=0 // pred_check_branch
    %11 = sbr.rel (0) target = $region9
  $region8: #{linear_sin_act.1} parent=0 // pred_region
    _
  $region9: #{linear_sin_act.1} parent=0 // pred_fallthru
    _
  // Predicated region
  $region10: #{linear_sin_act.1} parent=0 // pred_check
    _
  $region11: #{linear_sin_act.1} parent=0 // pred_check_branch
    %13 = sbr.rel (0) target = $region13
  $region12: #{linear_sin_act.1} parent=0 // pred_region
    _
  $region13: #{linear_sin_act.1} parent=0 // pred_fallthru
    _
  %p14 = scmp.eq.s32.totalorder 0, 0
  // Predicated region
  $region14: #{linear_sin_act.1} parent=0 // pred_check
    %p15 = pneg %p14
  $region15: #{linear_sin_act.1} parent=0 // pred_check_branch
    %17 = sbr.rel (%p15) target = $region17
  $region16: #{linear_sin_act.1} parent=0 // pred_region
    %v18 = vld [vmem:[%s2] sm:$0x1]
    %v20 = vlaneseq
    %v21 = vshrl.u32 %v20, 7
    %v22 = vsub.s32 0, %v21
    %v23 = vrot.slane %v18, %v22
    %25 = vst [vmem:[#allocation2] sm:$0xff] %v23
    %26 = vst [vmem:[#allocation2 + $0x8] sm:$0xff] %v23
  $region17: #{linear_sin_act.1} parent=0 // pred_fallthru
    _
  %v27 = vld [vmem:[#allocation2] sm:$0xff]
  %v28 = vld [vmem:[#allocation2 + $0x8] sm:$0xff]
  %v29 = vld [vmem:[%s0] sm:$0xff]
  %v30 = vld [vmem:[%s0 + $0x8] sm:$0xff]
  %v31 = vld [vmem:[%s1] sm:$0xff]
  %v32 = vld [vmem:[%s1 + $0x8] sm:$0xff]
  %v33 = vld [vmem:[%s1 + $0x10] sm:$0xff]
  %v34 = vld [vmem:[%s1 + $0x18] sm:$0xff]
  %v35 = vld [vmem:[%s1 + $0x20] sm:$0xff]
  %v36 = vld [vmem:[%s1 + $0x28] sm:$0xff]
  %v37 = vld [vmem:[%s1 + $0x30] sm:$0xff]
  %v38 = vld [vmem:[%s1 + $0x38] sm:$0xff]
  %v39 = vld [vmem:[%s1 + $0x40] sm:$0xff]
  %v40 = vld [vmem:[%s1 + $0x48] sm:$0xff]
  %v41 = vld [vmem:[%s1 + $0x50] sm:$0xff]
  %v42 = vld [vmem:[%s1 + $0x58] sm:$0xff]
  %v43 = vld [vmem:[%s1 + $0x60] sm:$0xff]
  %v44 = vld [vmem:[%s1 + $0x68] sm:$0xff]
  %v45 = vld [vmem:[%s1 + $0x70] sm:$0xff]
  %v46 = vld [vmem:[%s1 + $0x78] sm:$0xff]
  %47 = vmatprep.subr.mxu0 0.0
  %48 = vmatpush1.xpose.msra.mxu0 %v46
  %49 = vmatprep.subr.mxu0 0.0
  %50 = vmatpush1.xpose.msra.mxu0 %v45
  %51 = vmatprep.subr.mxu0 0.0
  %52 = vmatpush1.xpose.msra.mxu0 %v44
  %53 = vmatprep.subr.mxu0 0.0
  %54 = vmatpush1.xpose.msra.mxu0 %v43
  %55 = vmatprep.subr.mxu0 0.0
  %56 = vmatpush1.xpose.msra.mxu0 %v42
  %57 = vmatprep.subr.mxu0 0.0
  %58 = vmatpush1.xpose.msra.mxu0 %v41
  %59 = vmatprep.subr.mxu0 0.0
  %60 = vmatpush1.xpose.msra.mxu0 %v40
  %61 = vmatprep.subr.mxu0 0.0
  %62 = vmatpush1.xpose.msra.mxu0 %v39
  %63 = vmatprep.subr.mxu0 0.0
  %64 = vmatpush1.xpose.msra.mxu0 %v38
  %65 = vmatprep.subr.mxu0 0.0
  %66 = vmatpush1.xpose.msra.mxu0 %v37
  %67 = vmatprep.subr.mxu0 0.0
  %68 = vmatpush1.xpose.msra.mxu0 %v36
  %69 = vmatprep.subr.mxu0 0.0
  %70 = vmatpush1.xpose.msra.mxu0 %v35
  %71 = vmatprep.subr.mxu0 0.0
  %72 = vmatpush1.xpose.msra.mxu0 %v34
  %73 = vmatprep.subr.mxu0 0.0
  %74 = vmatpush1.xpose.msra.mxu0 %v33
  %75 = vmatprep.subr.mxu0 0.0
  %76 = vmatpush1.xpose.msra.mxu0 %v32
  %77 = vmatprep.subr.mxu0 0.0
  %78 = vmatpush1.xpose.msra.mxu0 %v31
  %79 = vmatprep.subr.mxu0 0.0
  %80 = vmatpush2.xpose.msra.mxu0 0.0
  %81 = vmatprep.subr.mxu0 0.0
  %82 = vmatpush2.xpose.msra.mxu0 0.0
  %83 = vmatprep.subr.mxu0 0.0
  %84 = vmatpush2.xpose.msra.mxu0 0.0
  %85 = vmatprep.subr.mxu0 0.0
  %86 = vmatpush2.xpose.msra.mxu0 0.0
  %87 = vmatprep.subr.mxu0 0.0
  %88 = vmatpush2.xpose.msra.mxu0 0.0
  %89 = vmatprep.subr.mxu0 0.0
  %90 = vmatpush2.xpose.msra.mxu0 0.0
  %91 = vmatprep.subr.mxu0 0.0
  %92 = vmatpush2.xpose.msra.mxu0 0.0
  %93 = vmatprep.subr.mxu0 0.0
  %94 = vmatpush2.xpose.msra.mxu0 0.0
  %95 = vmatprep.subr.mxu0 0.0
  %96 = vmatpush2.xpose.msra.mxu0 0.0
  %97 = vmatprep.subr.mxu0 0.0
  %98 = vmatpush2.xpose.msra.mxu0 0.0
  %99 = vmatprep.subr.mxu0 0.0
  %100 = vmatpush2.xpose.msra.mxu0 0.0
  %101 = vmatprep.subr.mxu0 0.0
  %102 = vmatpush2.xpose.msra.mxu0 0.0
  %103 = vmatprep.subr.mxu0 0.0
  %104 = vmatpush2.xpose.msra.mxu0 0.0
  %105 = vmatprep.subr.mxu0 0.0
  %106 = vmatpush2.xpose.msra.mxu0 0.0
  %107 = vmatprep.subr.mxu0 0.0
  %108 = vmatpush2.xpose.msra.mxu0 0.0
  %109 = vmatprep.subr.mxu0 0.0
  %110 = vmatpush2.xpose.msra.mxu0 0.0
  %111 = vmatprep.mubr.f32.mxu0 0.0
  %112 = vmatmul.mubr.f32.gmra.mxu0 %v29
  %v113 = vpop.f32.mrf.mxu0
  %v114 = vadd.f32 0.0, %v113
  %v115 = vpop.f32.mrf.mxu0
  %116 = vmatprep.mubr.f32.mxu0 0.0
  %117 = vmatmul.mubr.f32.gmra.mxu0 %v30
  %v118 = vpop.f32.mrf.mxu0
  %v119 = vadd.f32 0.0, %v118
  %v120 = vpop.f32.mrf.mxu0
  %121 = vdwg.mxu0
  %v122 = vadd.f32 %v27, %v114
  %v123 = vadd.f32 %v28, %v119
  %124 = vst [vmem:[#allocation2] sm:$0xff] %v122
  %125 = vst [vmem:[#allocation2 + $0x8] sm:$0xff] %v123
  // Predicated region
  $region18: #{linear_sin_act.1} parent=0 // pred_check
    %p126 = pneg %p14
  $region19: #{linear_sin_act.1} parent=0 // pred_check_branch
    %128 = sbr.rel (%p126) target = $region21
  $region20: #{linear_sin_act.1} parent=0 // pred_region
    %v129 = vld [vmem:[#allocation2] sm:$0xff]
    %v130 = vld [vmem:[#allocation2 + $0x8] sm:$0xff]
    %v131 = vand.u32 2147483647, %v129
    %vm132 = vcmp.le.f32.partialorder %v131, 0.7853982
    %vm133 = vcmp.lt.s32.totalorder %v129, 0
    %v134 = vand.u32 %v129, 2139095040
    %v135 = vshrl.u32 %v134, 23
    %v136 = vsub.s32 %v135, 127
    %v137 = vand.u32 2147483647, %v129
    %v138 = vand.u32 %v137, 8388607
    %v139 = vor.u32 %v138, 8388608
    %v140 = vsub.s32 0, %v139
    %v141 = vadd.s32 %v136, 1
    %vm142 = vcmp.gt.s32.totalorder %v141, 0
    %v143 = vsel %vm142, %v141, 0
    %v144 = vshrl.u32 %v143, 5
    %v145 = vand.u32 %v143, 31
    %v146 = vsub.s32 32, %v145
    %v147 = vshrl.u32 683565275, %v146
    %v148 = vshll.u32 683565275, %v145
    %v149 = vshrl.u32 2475754826, %v146
    %v150 = vor.u32 %v148, %v149
    %v151 = vshll.u32 2475754826, %v145
    %v152 = vshrl.u32 2131351028, %v146
    %v153 = vor.u32 %v151, %v152
    %v154 = vshll.u32 2131351028, %v145
    %v155 = vshrl.u32 2102212464, %v146
    %v156 = vor.u32 %v154, %v155
    %v157 = vshll.u32 2102212464, %v145
    %v158 = vshrl.u32 920167782, %v146
    %v159 = vor.u32 %v157, %v158
    %v160 = vshll.u32 920167782, %v145
    %v161 = vshrl.u32 1326507024, %v146
    %v162 = vor.u32 %v160, %v161
    %vm163 = vcmp.lt.s32.totalorder %v144, 1
    %vm164 = vcmp.lt.s32.totalorder %v144, 2
    %vm165 = vcmp.lt.s32.totalorder %v144, 3
    %vm166 = vcmp.lt.s32.totalorder %v144, 4
    %v167 = vsel %vm163, %v147, %v150
    %v168 = vsel %vm166, %v156, 2102212464
    %v169 = vsel %vm165, %v153, %v168
    %v170 = vsel %vm164, %v167, %v169
    %v171 = vsel %vm163, %v150, %v153
    %v172 = vsel %vm166, %v159, 920167782
    %v173 = vsel %vm165, %v156, %v172
    %v174 = vsel %vm164, %v171, %v173
    %v175 = vsel %vm163, %v153, %v156
    %v176 = vsel %vm166, %v162, 1326507024
    %v177 = vsel %vm165, %v159, %v176
    %v178 = vsel %vm164, %v175, %v177
    %v179 = vshll.u32 %v139, 8
    %v180 = vmul.u32.u64.compose %v179, %v178
    %v181 = vextract.low.u32 %v180
    %v182 = vextract.high.u32 %v180
    %v183 = vmul.u32.u64.compose %v179, %v174
    %v184 = vextract.low.u32 %v183
    %v185 = vextract.high.u32 %v183
    %v186 = vmul.u32 %v179, %v170
    %v187 = vadd.s32 %v182, %v184
    %vm188 = vc.u32 %v182, %v184
    %v189 = vadd.s32 %v185, 1
    %v190 = vsel %vm188, %v189, %v185
    %v191 = vadd.s32 %v186, %v190
    %v192 = vadd.s32 %v191, 536870912
    %v193 = vshrl.u32 %v192, 30
    %v194 = vshll.u32 %v193, 30
    %v195 = vsub.s32 %v191, %v194
    %vm196 = vcmp.lt.s32.totalorder %v195, 0
    %v197 = vsub.s32 0, %v195
    %v198 = vsel %vm196, %v197, %v195
    %v199 = vclz %v198
    %v200 = vsub.s32 %v199, 2
    %vm201 = vcmp.gt.s32.totalorder 0, %v200
    %v202 = vsel %vm201, 0, %v200
    %v203 = vsub.s32 32, %v202
    %v204 = vshll.u32 %v195, %v202
    %v205 = vshrl.u32 %v187, %v203
    %v206 = vor.u32 %v204, %v205
    %v207 = vsub.s32 4294967266, %v202
    %v208 = vadd.s32 %v207, 127
    %v209 = vshll.u32 %v208, 23
    %v210 = vor.u32 4788187, %v209
    %v211 = vand.u32 2147483647, %v210
    %v213 = vcvt.s32.f32 %v206
    %v214 = vmul.f32 %v213, %v211
    %v215 = vxor.u32 %v214, 2147483648
    %v216 = vsel %vm133, %v215, %v214
    %v217 = vsub.s32 4, %v193
    %v218 = vsel %vm133, %v217, %v193
    %v219 = vsel %vm132, %v129, %v216
    %v220 = vsel %vm132, 0, %v218
    %v221 = vcosq.f32.pop %v219
    %v222 = vsinq.f32.pop %v219
    %vm223 = vweird.f32 %v129
    %v224 = vadd.s32 %v220, 3
    %v225 = vand.u32 %v224, 3
    %vm226 = vcmp.lt.s32.totalorder %v225, 2
    %vm227 = vcmp.eq.s32.totalorder %v225, 0
    %v228 = vxor.u32 %v222, 2147483648
    %v229 = vsel %vm227, %v221, %v228
    %vm230 = vcmp.eq.s32.totalorder %v225, 2
    %v231 = vxor.u32 %v221, 2147483648
    %v232 = vsel %vm230, %v231, %v222
    %v233 = vsel %vm226, %v229, %v232
    %v234 = vsel %vm223, nan, %v233
    %v235 = vand.u32 2147483647, %v130
    %vm236 = vcmp.le.f32.partialorder %v235, 0.7853982
    %vm237 = vcmp.lt.s32.totalorder %v130, 0
    %v238 = vand.u32 %v130, 2139095040
    %v239 = vshrl.u32 %v238, 23
    %v240 = vsub.s32 %v239, 127
    %v241 = vand.u32 2147483647, %v130
    %v242 = vand.u32 %v241, 8388607
    %v243 = vor.u32 %v242, 8388608
    %v244 = vsub.s32 0, %v243
    %v245 = vadd.s32 %v240, 1
    %vm246 = vcmp.gt.s32.totalorder %v245, 0
    %v247 = vsel %vm246, %v245, 0
    %v248 = vshrl.u32 %v247, 5
    %v249 = vand.u32 %v247, 31
    %v250 = vsub.s32 32, %v249
    %v251 = vshrl.u32 683565275, %v250
    %v252 = vshll.u32 683565275, %v249
    %v253 = vshrl.u32 2475754826, %v250
    %v254 = vor.u32 %v252, %v253
    %v255 = vshll.u32 2475754826, %v249
    %v256 = vshrl.u32 2131351028, %v250
    %v257 = vor.u32 %v255, %v256
    %v258 = vshll.u32 2131351028, %v249
    %v259 = vshrl.u32 2102212464, %v250
    %v260 = vor.u32 %v258, %v259
    %v261 = vshll.u32 2102212464, %v249
    %v262 = vshrl.u32 920167782, %v250
    %v263 = vor.u32 %v261, %v262
    %v264 = vshll.u32 920167782, %v249
    %v265 = vshrl.u32 1326507024, %v250
    %v266 = vor.u32 %v264, %v265
    %vm267 = vcmp.lt.s32.totalorder %v248, 1
    %vm268 = vcmp.lt.s32.totalorder %v248, 2
    %vm269 = vcmp.lt.s32.totalorder %v248, 3
    %vm270 = vcmp.lt.s32.totalorder %v248, 4
    %v271 = vsel %vm267, %v251, %v254
    %v272 = vsel %vm270, %v260, 2102212464
    %v273 = vsel %vm269, %v257, %v272
    %v274 = vsel %vm268, %v271, %v273
    %v275 = vsel %vm267, %v254, %v257
    %v276 = vsel %vm270, %v263, 920167782
    %v277 = vsel %vm269, %v260, %v276
    %v278 = vsel %vm268, %v275, %v277
    %v279 = vsel %vm267, %v257, %v260
    %v280 = vsel %vm270, %v266, 1326507024
    %v281 = vsel %vm269, %v263, %v280
    %v282 = vsel %vm268, %v279, %v281
    %v283 = vshll.u32 %v243, 8
    %v284 = vmul.u32.u64.compose %v283, %v282
    %v285 = vextract.low.u32 %v284
    %v286 = vextract.high.u32 %v284
    %v287 = vmul.u32.u64.compose %v283, %v278
    %v288 = vextract.low.u32 %v287
    %v289 = vextract.high.u32 %v287
    %v290 = vmul.u32 %v283, %v274
    %v291 = vadd.s32 %v286, %v288
    %vm292 = vc.u32 %v286, %v288
    %v293 = vadd.s32 %v289, 1
    %v294 = vsel %vm292, %v293, %v289
    %v295 = vadd.s32 %v290, %v294
    %v296 = vadd.s32 %v295, 536870912
    %v297 = vshrl.u32 %v296, 30
    %v298 = vshll.u32 %v297, 30
    %v299 = vsub.s32 %v295, %v298
    %vm300 = vcmp.lt.s32.totalorder %v299, 0
    %v301 = vsub.s32 0, %v299
    %v302 = vsel %vm300, %v301, %v299
    %v303 = vclz %v302
    %v304 = vsub.s32 %v303, 2
    %vm305 = vcmp.gt.s32.totalorder 0, %v304
    %v306 = vsel %vm305, 0, %v304
    %v307 = vsub.s32 32, %v306
    %v308 = vshll.u32 %v299, %v306
    %v309 = vshrl.u32 %v291, %v307
    %v310 = vor.u32 %v308, %v309
    %v311 = vsub.s32 4294967266, %v306
    %v312 = vadd.s32 %v311, 127
    %v313 = vshll.u32 %v312, 23
    %v314 = vor.u32 4788187, %v313
    %v315 = vand.u32 2147483647, %v314
    %v317 = vcvt.s32.f32 %v310
    %v318 = vmul.f32 %v317, %v315
    %v319 = vxor.u32 %v318, 2147483648
    %v320 = vsel %vm237, %v319, %v318
    %v321 = vsub.s32 4, %v297
    %v322 = vsel %vm237, %v321, %v297
    %v323 = vsel %vm236, %v130, %v320
    %v324 = vsel %vm236, 0, %v322
    %v325 = vcosq.f32.pop %v323
    %v326 = vsinq.f32.pop %v323
    %vm327 = vweird.f32 %v130
    %v328 = vadd.s32 %v324, 3
    %v329 = vand.u32 %v328, 3
    %vm330 = vcmp.lt.s32.totalorder %v329, 2
    %vm331 = vcmp.eq.s32.totalorder %v329, 0
    %v332 = vxor.u32 %v326, 2147483648
    %v333 = vsel %vm331, %v325, %v332
    %vm334 = vcmp.eq.s32.totalorder %v329, 2
    %v335 = vxor.u32 %v325, 2147483648
    %v336 = vsel %vm334, %v335, %v326
    %v337 = vsel %vm330, %v333, %v336
    %v338 = vsel %vm327, nan, %v337
    %339 = vst [vmem:[%s3] sm:$0xff] %v234
    %340 = vst [vmem:[%s3 + $0x8] sm:$0xff] %v338
  $region21: #{linear_sin_act.1} parent=0 // pred_fallthru
    _
  // Predicated region
  $region22: #{linear_sin_act.1} parent=0 // pred_check
    _
  $region23: #{linear_sin_act.1} parent=0 // pred_check_branch
    %342 = sbr.rel (0) target = $region25
  $region24: #{linear_sin_act.1} parent=0 // pred_region
    _
  $region25: #{linear_sin_act.1} parent=0 // pred_fallthru
    _
  // Predicated region
  $region26: #{linear_sin_act.1} parent=0 // pred_check
    _
  $region27: #{linear_sin_act.1} parent=0 // pred_check_branch
    %344 = sbr.rel (0) target = $region29
  $region28: #{linear_sin_act.1} parent=0 // pred_region
    _
  $region29: #{linear_sin_act.1} parent=0 // pred_fallthru
    _

</llo_original>
